<compile_context>
chip_gen: v5e
topology: v5e:2x2
jax: 0.10.0
libtpu: 0.0.40
codegen_flags: <defaults>
</compile_context>

<pallas_src>
import functools

import jax
import jax.numpy as jnp
import numpy as np
from jax import lax
from jax.experimental import pallas as pl
from jax.experimental.pallas import tpu as pltpu


# --------------------------------------------------------------------------
# pass 1: row L2 normalization, MXU-operand cast fused into the store
# --------------------------------------------------------------------------
def _normalize_kernel(z_ref, o_ref, *, eps):
    z = z_ref[...].astype(jnp.float32)                         # (TQ, D)
    nrm = jnp.sqrt(jnp.sum(z * z, axis=1, keepdims=True))
    # NOTE: clamps each norm separately (torch.nn.CosineSimilarity clamps the
    # norm product); identical unless a vector is ~zero.
    o_ref[...] = (z / jnp.maximum(nrm, jnp.float32(eps))).astype(o_ref.dtype)


def _l2_normalize(z, mm_dtype, *, eps=1e-8):
    n, d = z.shape
    tq = max(t for t in (256, 128, 64, 32, 16, 8) if n % t == 0)
    return pl.pallas_call(
        functools.partial(_normalize_kernel, eps=eps),
        grid=(n // tq,),
        in_specs=[pl.BlockSpec((tq, d), lambda i: (i, 0))],
        out_specs=pl.BlockSpec((tq, d), lambda i: (i, 0)),
        out_shape=jax.ShapeDtypeStruct((n, d), mm_dtype),
        compiler_params=pltpu.CompilerParams(
            dimension_semantics=("parallel",)),
    )(z)


# --------------------------------------------------------------------------
# pass 2: fused per-row-tile NT-Xent over the combined (2N, 2N) problem
# --------------------------------------------------------------------------
def _nt_xent_kernel(zi_ref, zj_ref, out_ref, k_vmem, copy_sem, *,
                    temperature, inv_n, tq, n_rows):
    h = pl.program_id(0)          # 0 -> z_i query rows, 1 -> z_j query rows
    j = pl.program_id(1)          # row-tile index within the half

    # One-time (per TensorCore) load of the full normalized block into a
    # SINGLE-buffered VMEM scratch (half the VMEM of a double-buffered
    # constant-index BlockSpec).  The inner grid axis is "arbitrary", so every
    # core starts at j == 0 for each h it owns; on single-core chips the guard
    # refires once at (h=1, j=0) and harmlessly re-copies the same data.
    @pl.when(j == 0)
    def _():
        cp_i = pltpu.make_async_copy(zi_ref, k_vmem.at[pl.ds(0, n_rows)],
                                     copy_sem.at[0])
        cp_j = pltpu.make_async_copy(zj_ref, k_vmem.at[pl.ds(n_rows, n_rows)],
                                     copy_sem.at[1])
        cp_i.start()
        cp_j.start()
        cp_i.wait()
        cp_j.wait()

    inv_t = jnp.float32(1.0 / temperature)

    # Query and positive-partner tiles are sliced out of the resident block
    # (no extra DMA streams; the (TQ, D) VMEM slice copy is cheap).
    q_start = pl.multiple_of(h * n_rows + j * tq, tq)
    p_start = pl.multiple_of((1 - h) * n_rows + j * tq, tq)
    q = k_vmem[pl.ds(q_start, tq), :]          # (TQ, D)
    p = k_vmem[pl.ds(p_start, tq), :]          # (TQ, D)

    # Single (TQ, 2N) MXU matmul per row tile; contract the feature dims
    # directly (q @ k.T form, as in flash attention) -- no rhs relayout.
    # inv_t is applied on the sim slab (one VALU op); pre-scaling q would add
    # bf16 rounding and the EUP exp over (TQ, 2N) is the saturating slot.
    dn = (((1,), (1,)), ((), ()))
    sim = lax.dot_general(q, k_vmem[...], dn,
                          preferred_element_type=jnp.float32) * inv_t

    qf = q.astype(jnp.float32)
    pf = p.astype(jnp.float32)
    # Positive / self logits from the SAME (possibly bf16) operands the MXU
    # consumed, accumulated in f32, so the self-term cancellation below is
    # consistent with the matmul path.
    pos = jnp.sum(qf * pf, axis=1, keepdims=True) * inv_t      # (TQ, 1)
    selfs = jnp.sum(qf * qf, axis=1, keepdims=True) * inv_t    # (TQ, 1)

    # Rows are unit norm, so every logit <= 1/temperature: use that constant
    # as the logsumexp shift (no row max, no iota/select masking) and remove
    # the self column by subtracting its exp term from the row sum.  Requires
    # temperature >= ~0.03 (checked in the wrapper).
    m = inv_t
    expsum = jnp.sum(jnp.exp(sim - m), axis=1, keepdims=True)  # (TQ, 1)
    lse = m + jnp.log(expsum - jnp.exp(selfs - m))             # (TQ, 1)

    partial = jnp.sum(lse - pos, axis=0, keepdims=True) * jnp.float32(inv_n)
    # Lane-dense (8, 128) block store (no masked vst); wrapper reads one lane.
    out_ref[...] = jnp.broadcast_to(partial, out_ref.shape)
    # TODO(synk): the rank-0 debug print of r = mean(exp(pos)/sum(exp(neg)))
    # in the reference forward is a side effect only (not returned); omitted.


def _default_block_rows(n, two_n, d, mm_bytes):
    """Largest row tile that divides N and keeps the per-core working set
    (single-buffered resident block + ~3x f32 sim slab) under ~48 MiB so the
    same tiling fits v7x's 64 MiB/TC; v5e/v6e (128 MiB physical) are looser.
    256 matches the v6e/v7x MXU M dimension, 128 matches v5e."""
    budget = 48 * 2**20 - two_n * d * mm_bytes
    for tq in (256, 128, 64, 32, 16, 8):
        if n % tq == 0 and 3 * tq * two_n * 4 <= budget:
            return tq
    return 8


def _pass2_vmem_limit(two_n, d, tq, mm_bytes):
    resident = two_n * d * mm_bytes                    # single-buffered scratch
    sim = tq * two_n * 4                               # f32 sim slab
    tiles = 2 * tq * d * (4 + mm_bytes)                # q/p slices + f32 copies
    need = resident + 3 * sim + tiles + 2 * 8 * 128 * 4
    need = int(need * 1.5)                             # compiler headroom
    return max(32 * 1024 * 1024, min(need, 96 * 1024 * 1024))


def nt_xent(z_i, z_j, temperature=0.5, *, block_rows=None,
            use_bf16_matmul=True):
    """NT-Xent loss (world_size == 1). Returns (loss_i, loss_j)."""
    n, d = z_i.shape
    assert z_j.shape == (n, d)
    assert n % 8 == 0, "per-device batch size must be a multiple of 8"
    if temperature < 0.03:
        raise ValueError(
            "nt_xent uses a constant 1/temperature logsumexp shift that "
            "assumes temperature >= ~0.03; use a row-max variant for tiny "
            "temperatures.")
    two_n = 2 * n

    # bf16 MXU operands by default (v5e/v6e/v7x MXUs are bf16-native, and it
    # halves the resident block); normalization, exp/log and all reductions
    # stay f32 inside the kernels.
    mm_dtype = jnp.bfloat16 if use_bf16_matmul else jnp.float32
    mm_bytes = 2 if use_bf16_matmul else 4

    if block_rows is None:
        block_rows = _default_block_rows(n, two_n, d, mm_bytes)
    tq = int(min(block_rows, n))
    assert n % tq == 0 and tq % 8 == 0, \
        "block_rows must divide N and be a multiple of 8"
    half_tiles = n // tq
    num_tiles = 2 * half_tiles

    # --- pass 1: per-half normalization (cast fused; no concat round trip) --
    # TODO(synk): the world_size > 1 all_gather/reordering path is distributed
    # host logic with no single-kernel equivalent; identity here.
    zi_n = _l2_normalize(z_i, mm_dtype)
    zj_n = _l2_normalize(z_j, mm_dtype)

    # --- pass 2: fused loss ------------------------------------------------
    kernel = functools.partial(
        _nt_xent_kernel, temperature=float(temperature), inv_n=1.0 / n,
        tq=tq, n_rows=n)
    partials = pl.pallas_call(
        kernel,
        grid=(2, half_tiles),
        in_specs=[pl.BlockSpec(memory_space=pl.ANY),    # z_i rows (normalized)
                  pl.BlockSpec(memory_space=pl.ANY)],   # z_j rows (normalized)
        out_specs=pl.BlockSpec((8, 128), lambda h, j: (h * half_tiles + j, 0)),
        out_shape=jax.ShapeDtypeStruct((num_tiles * 8, 128), jnp.float32),
        scratch_shapes=[pltpu.VMEM((two_n, d), mm_dtype),   # resident block
                        pltpu.SemaphoreType.DMA((2,))],
        compiler_params=pltpu.CompilerParams(
            dimension_semantics=("parallel", "arbitrary"),
            vmem_limit_bytes=_pass2_vmem_limit(two_n, d, tq, mm_bytes)),
    )(zi_n, zj_n)

    per_tile = partials[::8, 0]                   # (num_tiles,)
    loss_i = jnp.sum(per_tile[:half_tiles])
    loss_j = jnp.sum(per_tile[half_tiles:])
    return loss_i, loss_j


def nt_xent_ref(z_i, z_j, temperature=0.5):
    """Pure-JAX reference mirroring the PyTorch forward (world_size == 1)."""
    n = z_i.shape[0]
    zi_n = z_i / jnp.maximum(jnp.linalg.norm(z_i, axis=1, keepdims=True), 1e-8)
    zj_n = z_j / jnp.maximum(jnp.linalg.norm(z_j, axis=1, keepdims=True), 1e-8)
    z_all = jnp.concatenate([zi_n, zj_n], axis=0)
    sim_i = zi_n @ z_all.T / temperature
    sim_j = zj_n @ z_all.T / temperature
    idx = jnp.arange(n)
    pos_i = sim_i[idx, idx + n]
    pos_j = sim_j[idx, idx]
    mask_i = jnp.where(jnp.arange(2 * n)[None, :] == idx[:, None], -jnp.inf, sim_i)
    mask_j = jnp.where(jnp.arange(2 * n)[None, :] == (idx + n)[:, None], -jnp.inf, sim_j)
    loss_i = jnp.sum(jax.scipy.special.logsumexp(mask_i, axis=1) - pos_i) / n
    loss_j = jnp.sum(jax.scipy.special.logsumexp(mask_j, axis=1) - pos_j) / n
    return loss_i, loss_j


if __name__ == "__main__":
    temperature = 0.5
    base_key = jax.random.PRNGKey(0)

    # f32 MXU-operand path (tight tolerance). Covers: single tile per half,
    # multiple tiles per half (n=16, tq=8), and the default tile picker.
    for n, d, tq in ((8, 128, 8), (16, 128, 8), (16, 256, None)):
        k1, k2 = jax.random.split(jax.random.fold_in(base_key, 17 * n + d))
        z_i = jax.random.normal(k1, (n, d), jnp.float32)
        z_j = jax.random.normal(k2, (n, d), jnp.float32)
        loss_i, loss_j = jax.block_until_ready(
            nt_xent(z_i, z_j, temperature, block_rows=tq,
                    use_bf16_matmul=False))
        ref_i, ref_j = nt_xent_ref(z_i, z_j, temperature)
        np.testing.assert_allclose(np.asarray(loss_i), np.asarray(ref_i),
                                   rtol=1e-5, atol=1e-5)
        np.testing.assert_allclose(np.asarray(loss_j), np.asarray(ref_j),
                                   rtol=1e-5, atol=1e-5)

    # Default path: bf16 MXU operands, f32 accumulation/EUP math (looser tol).
    k1, k2 = jax.random.split(jax.random.fold_in(base_key, 999))
    z_i = jax.random.normal(k1, (8, 128), jnp.float32)
    z_j = jax.random.normal(k2, (8, 128), jnp.float32)
    li, lj = jax.block_until_ready(nt_xent(z_i, z_j, temperature))
    ri, rj = nt_xent_ref(z_i, z_j, temperature)
    np.testing.assert_allclose(np.asarray(li), np.asarray(ri), rtol=5e-2, atol=5e-2)
    np.testing.assert_allclose(np.asarray(lj), np.asarray(rj), rtol=5e-2, atol=5e-2)

    print("KERNEL_OK")
</pallas_src>

<mosaic_0001>
module attributes {stable_mosaic.version = 11 : i64} {
  func.func @_normalize_kernel(%arg0: i32, %arg1: memref<8x128xf32, #tpu.memory_space<vmem>>, %arg2: memref<8x128xf32, #tpu.memory_space<vmem>>) attributes {dimension_semantics = [#tpu.dimension_semantics<parallel>], iteration_bounds = array<i64: 1>, scalar_prefetch = 0 : i64, scratch_operands = 0 : i64, tpu.core_type = #tpu.core_type<tc>, window_params = [{transform_indices = @transform_0, window_bounds = array<i64: 8, 128>}, {transform_indices = @transform_1, window_bounds = array<i64: 8, 128>}]} {
    %c0 = arith.constant 0 : index
    %c0_0 = arith.constant 0 : index
    %0 = vector.load %arg1[%c0, %c0_0] : memref<8x128xf32, #tpu.memory_space<vmem>>, vector<8x128xf32>
    %1 = arith.mulf %0, %0 : vector<8x128xf32>
    %cst = arith.constant dense<0.000000e+00> : vector<8xf32>
    %2 = vector.multi_reduction <add>, %1, %cst [1] : vector<8x128xf32> to vector<8xf32>
    %3 = vector.shape_cast %2 : vector<8xf32> to vector<8x1xf32>
    %4 = math.sqrt %3 : vector<8x1xf32>
    %cst_1 = arith.constant 9.99999993E-9 : f32
    %5 = vector.broadcast %cst_1 : f32 to vector<8x1xf32>
    %6 = arith.maximumf %4, %5 : vector<8x1xf32>
    %7 = vector.broadcast %6 : vector<8x1xf32> to vector<8x128xf32>
    %8 = arith.divf %0, %7 : vector<8x128xf32>
    %c0_2 = arith.constant 0 : index
    %c0_3 = arith.constant 0 : index
    %9 = vector.load %arg2[%c0_2, %c0_3] : memref<8x128xf32, #tpu.memory_space<vmem>>, vector<8x128xf32>
    tpu.vector_store %arg2[%c0_2, %c0_3], %8 {strides = array<i32>} : memref<8x128xf32, #tpu.memory_space<vmem>>, vector<8x128xf32>,
    return
  }
  func.func @transform_0(%arg0: i32) -> (i32, i32) {
    %c0_i32 = arith.constant 0 : i32
    %c0_i32_0 = arith.constant 0 : i32
    return %arg0, %c0_i32 : i32, i32
  }
  func.func @transform_1(%arg0: i32) -> (i32, i32) {
    %c0_i32 = arith.constant 0 : i32
    %c0_i32_0 = arith.constant 0 : i32
    return %arg0, %c0_i32 : i32, i32
  }
}

</mosaic_0001>

<llo_original>
// kernel: tpu_custom_call.1
$region0: #{tpu_custom_call.1}
  #allocation0 [shape = 'u32[]', space=smem, size = 0x4, offset = 0x4, fixed_abs, tag = 'smem constant byte address 0x4 - core index']
  #allocation1 [shape = 'u32[72,128]{1,0:T(1,128)}', space=vmem, size = 0x9000, scoped, tag = 'internal scratch']
  %s0 = inlined_call_operand.hbm [shape: f32[8,128], index: 0, kind: input, shape index: {}]
  %s1 = inlined_call_operand.hbm [shape: f32[8,128], index: 1, kind: output, shape index: {}]
  %s2 = sld [smem:[#allocation0]]
  $region18: #{tpu_custom_call.1} parent=0
    _
  %s4 = ssub.s32 1, %s2
  %s5 = scalar_select 0, %s4, %s2
  $region1: #{tpu_custom_call.1} parent=0
    #allocation2 [shape = 'u8[4096]{0}', space=vmem, size = 0x1000, scoped, tag = 'input window, operand 0, single buffered']
    #allocation3 [shape = 's32[1]{0}', space=sflag, size = 0x4, scoped, tag = 'scoped memory for tpu_custom_call.1']
    #allocation4 [shape = 's32[1]{0}', space=sflag, size = 0x4, scoped, tag = 'scoped memory for tpu_custom_call.1']
    #allocation5 [shape = 'u8[4096]{0}', space=vmem, size = 0x1000, scoped, tag = 'output window, operand 0, single buffered']
    %6 = vsyncpa [#allocation3], 0
    %7 = vsyncpa [#allocation4], 0
    // Predicated region
    $region2: #{tpu_custom_call.1} parent=1 // pred_check
      _
    $region3: #{tpu_custom_call.1} parent=1 // pred_check_branch
      %9 = sbr.rel (0) target = $region5
    $region4: #{tpu_custom_call.1} parent=1 // pred_region
      %11 = vsyncadd [#allocation3], 0
      %s13 = sshll.u32 %s0, 4
      %s14 = int_to_ptr.hbm [resolvable:$true] %s13
      %s15 = sshll.u32 [#allocation2], 4
      %s16 = int_to_ptr.vmem [resolvable:$true] %s15
      %18 = dma.hbm_to_vmem [thread:$0]  %s14, 128, %s16, [#allocation3]
    $region5: #{tpu_custom_call.1} parent=1 // pred_fallthru
      _
    // Predicated region
    $region6: #{tpu_custom_call.1} parent=1 // pred_check
      _
    $region7: #{tpu_custom_call.1} parent=1 // pred_check_branch
      %20 = sbr.rel (0) target = $region9
    $region8: #{tpu_custom_call.1} parent=1 // pred_region
      %22 = dma.done [#allocation3], 128
    $region9: #{tpu_custom_call.1} parent=1 // pred_fallthru
      _
    %v23 = vld [vmem:[#allocation2] sm:$0xff]
    %v24 = vmul.f32 %v23, %v23
    %25 = vadd.xlane.f32.xlu0 %v24
    %v26 = vpop.xlane.xlu0 %25
    %v27 = vrsqrt.pop %v26
    %v28 = vmul.f32 %v27, %v26
    %v29 = vmul.f32 %v28, %v27
    %v30 = vmul.f32 0.5, %v29
    %v31 = vsub.f32 1.5, %v30
    %v32 = vmul.f32 %v27, %v31
    %v33 = vmul.f32 %v26, %v32
    %vm34 = vcmp.eq.f32.partialorder %v26, inf
    %v35 = vsel %vm34, %v26, %v33
    %vm36 = vcmp.eq.f32.partialorder %v26, 0.0
    %v37 = vand.u32 %v26, 2147483648
    %v38 = vsel %vm36, %v37, %v35
    %v39 = vmax.f32 %v38, 1e-08
    %v40 = vrcp.pop %v39
    %v41 = vmul.f32 %v39, %v40
    %v42 = vsub.f32 1.0, %v41
    %v43 = vmul.f32 %v40, %v42
    %v44 = vadd.f32 %v40, %v43
    %vm45 = vweird.f32 %v39
    %vm46 = vweird.f32 %v40
    %vm47 = vmor %vm45, %vm46
    %v48 = vsel %vm47, %v40, %v44
    %v49 = vand.u32 2147483647, %v39
    %vm50 = vcmp.eq.f32.partialorder %v49, 8.507059e+37
    %v51 = vand.u32 %v39, 2147483648
    %v52 = vor.u32 1.1754944e-38, %v51
    %v53 = vsel %vm50, %v52, %v48
    %v54 = vmul.f32 %v23, %v53
    %55 = vst [vmem:[#allocation5] sm:$0xff] %v54
    // Predicated region
    $region10: #{tpu_custom_call.1} parent=1 // pred_check
      _
    $region11: #{tpu_custom_call.1} parent=1 // pred_check_branch
      %57 = sbr.rel (0) target = $region13
    $region12: #{tpu_custom_call.1} parent=1 // pred_region
      %59 = vsyncadd [#allocation4], 0
      %s61 = sshll.u32 [#allocation5], 4
      %s62 = int_to_ptr.vmem [resolvable:$true] %s61
      %s63 = sshll.u32 %s1, 4
      %s64 = int_to_ptr.hbm [resolvable:$true] %s63
      %66 = dma.vmem_to_hbm [thread:$0]  %s62, 128, %s64, [#allocation4]
    $region13: #{tpu_custom_call.1} parent=1 // pred_fallthru
      _
    // Predicated region
    $region14: #{tpu_custom_call.1} parent=1 // pred_check
      _
    $region15: #{tpu_custom_call.1} parent=1 // pred_check_branch
      %68 = sbr.rel (0) target = $region17
    $region16: #{tpu_custom_call.1} parent=1 // pred_region
      %70 = dma.done [#allocation4], 128
    $region17: #{tpu_custom_call.1} parent=1 // pred_fallthru
      _
    %71 = vsyncpa [#allocation3], 1
    %72 = vsyncpa [#allocation4], 1

</llo_original>
